<compile_context>
chip_gen: v6e
topology: v6e:2x2x1
jax: 0.10.0
libtpu: 0.0.40
codegen_flags: <defaults>
</compile_context>

<pallas_src>
import functools
import math

import jax
import jax.numpy as jnp
from jax.experimental import pallas as pl
from jax.experimental.pallas import tpu as pltpu

_LANE = 128


def _round_up(n, m):
    return ((n + m - 1) // m) * m


# ----------------------------------------------------------------------------
# Kernels
# ----------------------------------------------------------------------------
def _packed_mlp_kernel(*refs, num_linear):
    """Lane-packed ensemble: refs = (x, w0, b0, ..., w_{L-1}, b_{L-1}, out).

    Weights are lane-stacked / block-diagonal packed bf16 ensemble weights, so
    a single MXU matmul per layer evaluates every ensemble member at once.
    """
    x_ref = refs[0]
    out_ref = refs[-1]
    p = refs[1:-1]
    h = x_ref[...]                                   # f32 batch tile
    for i in range(num_linear):
        w = p[2 * i][...]                            # bf16 packed weight
        b = p[2 * i + 1][...]                        # f32 bias row
        h = jnp.dot(h.astype(w.dtype), w, preferred_element_type=jnp.float32) + b
        if i < num_linear - 1:
            h = jnp.maximum(h, 0.0)                  # ReLU in f32 (VPU)
    out_ref[...] = h.astype(out_ref.dtype)


def _member_mlp_kernel(*refs, num_linear):
    """Per-member path: grid = (E, batch tiles); weight refs are (1, din, dout)."""
    x_ref = refs[0]
    out_ref = refs[-1]
    p = refs[1:-1]
    h = x_ref[...]                                   # f32 batch tile (shared by members)
    for i in range(num_linear):
        w = p[2 * i][0]                              # (din, dout) bf16, this member
        b = p[2 * i + 1][0]                          # (1, dout) f32
        h = jnp.dot(h.astype(w.dtype), w, preferred_element_type=jnp.float32) + b
        if i < num_linear - 1:
            h = jnp.maximum(h, 0.0)
    out_ref[0] = h.astype(out_ref.dtype)             # output already (E, B, dout) layout


# ----------------------------------------------------------------------------
# Parameter init (mimics LayerLinear.reset_parameters) and packing
# ----------------------------------------------------------------------------
def init_net_dense_params(key, dim_x, dim_y, num_h, dim_h, size_ensemble=1):
    """kaiming_uniform_(a=sqrt(5)) on a (din, dout) tensor -> fan_in = dout."""
    dims = [(dim_x, dim_h)] + [(dim_h, dim_h)] * (num_h - 1) + [(dim_h, dim_y)]
    params = []
    for (din, dout) in dims:
        key, kw, kb = jax.random.split(key, 3)
        fan_in = dout
        gain = math.sqrt(2.0 / (1.0 + 5.0))
        w_bound = gain * math.sqrt(3.0 / fan_in)
        b_bound = 1.0 / math.sqrt(fan_in)
        w = jax.random.uniform(kw, (size_ensemble, din, dout), jnp.float32,
                               -w_bound, w_bound)
        b = jax.random.uniform(kb, (size_ensemble, 1, dout), jnp.float32,
                               -b_bound, b_bound)
        params.append((w, b))
    return params, key


def _block_diag(mats):
    e = len(mats)
    if e == 1:
        return mats[0]
    din, dout = mats[0].shape
    out = jnp.zeros((e * din, e * dout), mats[0].dtype)
    for i, m in enumerate(mats):
        out = out.at[i * din:(i + 1) * din, i * dout:(i + 1) * dout].set(m)
    return out


def pack_ensemble_params(params, *, max_packed_width=256, weight_dtype=jnp.bfloat16):
    """Pre-pack the ensemble weights once at setup time.

    Small ensembles (E*dim_h <= max_packed_width): stack along the lane axis so
    ONE matmul per layer evaluates every member:
        layer 0 : (E, dim_x, dim_h) -> (dim_x, E*dim_h)   (shared input x)
        hidden  : (E, dim_h, dim_h) -> block-diag (E*dim_h, E*dim_h)
        head    : block-diag, zero-padded to a multiple of 128 output lanes
    Large ensembles: keep (E, din, dout) stacks (an ensemble grid axis selects
    the member), head padded to a multiple of 128 output lanes.
    Weights cast to bf16 (MXU-native); biases stay f32.
    """
    E = int(params[0][0].shape[0])
    dim_x = int(params[0][0].shape[1])
    dim_h = int(params[0][0].shape[2])
    dim_y = int(params[-1][0].shape[2])
    num_linear = len(params)
    # Useful FLOPs per batch row (excludes zero block-diag / lane-padding work).
    flops_per_row = 2 * E * sum(int(w.shape[1]) * int(w.shape[2]) for w, _ in params)

    packed_mode = (E == 1) or (E * dim_h <= max_packed_width)
    layers = []
    if packed_mode:
        out_pad = _round_up(max(E * dim_y, 1), _LANE)
        for idx, (w, b) in enumerate(params):
            e, din, dout = w.shape
            if idx == 0:
                w_p = jnp.concatenate([w[i] for i in range(e)], axis=1)
            else:
                w_p = _block_diag([w[i] for i in range(e)])
            b_p = b.reshape(1, e * dout)
            if idx == num_linear - 1:               # lane-dense head
                w_p = jnp.pad(w_p, ((0, 0), (0, out_pad - w_p.shape[1])))
                b_p = jnp.pad(b_p, ((0, 0), (0, out_pad - b_p.shape[1])))
            layers.append((w_p.astype(weight_dtype), b_p.astype(jnp.float32)))
    else:
        out_pad = _round_up(max(dim_y, 1), _LANE)
        for idx, (w, b) in enumerate(params):
            if idx == num_linear - 1:               # lane-dense head
                w = jnp.pad(w, ((0, 0), (0, 0), (0, out_pad - w.shape[2])))
                b = jnp.pad(b, ((0, 0), (0, 0), (0, out_pad - b.shape[2])))
            layers.append((w.astype(weight_dtype), b.astype(jnp.float32)))

    param_bytes = sum(int(w.size) * w.dtype.itemsize + int(b.size) * 4
                      for w, b in layers)
    max_width = max([dim_x] + [int(w.shape[-1]) for w, _ in layers])
    return dict(mode="packed" if packed_mode else "per_member", layers=layers,
                E=E, dim_y=dim_y, out_pad=out_pad, max_width=max_width,
                flops_per_row=flops_per_row, param_bytes=param_bytes)


def _pinned_spec(shape):
    """Grid-invariant operand pinned in VMEM, single-buffered (pl.Buffered(1))
    so constant-index blocks don't pay the default 2x buffer residency."""
    nd = len(shape)
    index_map = lambda *_: (0,) * nd
    try:
        return pl.BlockSpec(shape, index_map,
                            pipeline_mode=pl.Buffered(buffer_count=1))
    except TypeError:   # older jax without pipeline_mode kwarg
        return pl.BlockSpec(shape, index_map)


# ----------------------------------------------------------------------------
# Forward
# ----------------------------------------------------------------------------
def net_dense_forward(x, packed, *, batch_tile=512, core_parallel_batch=False):
    """NetDense.forward: returns (means, stds), each (E, B, dim_y) float32.

    batch_tile: sweep up (512->1024) on v5e/v6e (128 MiB VMEM); keep 256-512 on
    v7x (64 MiB).  It auto-shrinks if the per-step footprint is too big.
    core_parallel_batch: mark the batch grid axis CORE_PARALLEL so v7x shards
    it across its two TensorCores (leave False on single-TC v5e/v6e).
    """
    B, dim_x = x.shape
    E = packed["E"]
    dim_y = packed["dim_y"]
    out_pad = packed["out_pad"]
    layers = packed["layers"]
    num_linear = len(layers)
    packed_mode = packed["mode"] == "packed"

    # ---- batch tiling: pad B so the pipelined path handles any batch size ---
    tb = max(8, _round_up(min(batch_tile, B), 8))

    def footprint(t):   # rough per-step VMEM bytes
        act = 3 * t * max(packed["max_width"], dim_x) * 4      # f32 h + bf16 copy + dot result
        io = 2 * t * dim_x * 4 + 2 * t * out_pad * 4           # double-buffered x / out tiles
        return 2 * packed["param_bytes"] + act + io

    while tb > 8 and footprint(tb) > (28 << 20):               # keep v7x-safe
        tb = max(8, _round_up(tb // 2, 8))
    B_pad = _round_up(B, tb)
    if B_pad != B:
        x = jnp.pad(x, ((0, B_pad - B), (0, 0)))               # garbage rows sliced off below
    nb = B_pad // tb

    vmem_limit = int(min(max(2 * footprint(tb), 32 << 20), 64 << 20))
    batch_sem = pltpu.CORE_PARALLEL if core_parallel_batch else pltpu.PARALLEL

    out_rows = B_pad if packed_mode else E * B_pad
    cost = pl.CostEstimate(
        flops=int(packed["flops_per_row"]) * B_pad, transcendentals=0,
        bytes_accessed=B_pad * dim_x * 4 + packed["param_bytes"] + out_rows * out_pad * 4)

    flat = [x]
    for w, b in layers:
        flat += [w, b]

    if packed_mode:
        kernel = functools.partial(_packed_mlp_kernel, num_linear=num_linear)
        in_specs = [pl.BlockSpec((tb, dim_x), lambda i: (i, 0))]
        for w, b in layers:
            in_specs += [_pinned_spec(w.shape), _pinned_spec(b.shape)]
        y = pl.pallas_call(
            kernel,
            out_shape=jax.ShapeDtypeStruct((B_pad, out_pad), jnp.float32),
            grid=(nb,),
            in_specs=in_specs,
            out_specs=pl.BlockSpec((tb, out_pad), lambda i: (i, 0)),
            compiler_params=pltpu.CompilerParams(
                dimension_semantics=(batch_sem,),
                vmem_limit_bytes=vmem_limit),
            cost_estimate=cost,
        )(*flat)
        valid = E * dim_y
        means = y[:B, :valid].reshape(B, E, dim_y).transpose(1, 0, 2)
    else:
        kernel = functools.partial(_member_mlp_kernel, num_linear=num_linear)
        in_specs = [pl.BlockSpec((tb, dim_x), lambda e, i: (i, 0))]
        for w, b in layers:
            in_specs += [
                pl.BlockSpec((1,) + tuple(w.shape[1:]), lambda e, i: (e, 0, 0)),
                pl.BlockSpec((1,) + tuple(b.shape[1:]), lambda e, i: (e, 0, 0)),
            ]
        y = pl.pallas_call(
            kernel,
            out_shape=jax.ShapeDtypeStruct((E, B_pad, out_pad), jnp.float32),
            grid=(E, nb),
            in_specs=in_specs,
            out_specs=pl.BlockSpec((1, tb, out_pad), lambda e, i: (e, i, 0)),
            compiler_params=pltpu.CompilerParams(
                dimension_semantics=(pltpu.PARALLEL, batch_sem),
                vmem_limit_bytes=vmem_limit),
            cost_estimate=cost,
        )(*flat)
        means = y[:, :B, :dim_y]    # already (E, B, dim_y) layout -- no transpose copy

    # TODO(synk): stds is a constant ones tensor per the reference; callers that
    # only need means should skip materializing it.
    stds = jnp.ones_like(means)
    return means, stds


# ----------------------------------------------------------------------------
# Pure-JAX reference (same math as the PyTorch module)
# ----------------------------------------------------------------------------
def _reference_net_dense(x, params, *, weight_dtype=jnp.float32):
    E = params[0][0].shape[0]
    h = jnp.broadcast_to(x, (E,) + x.shape).astype(jnp.float32)
    for i, (w, b) in enumerate(params):
        h = jnp.einsum('ebi,eio->ebo', h.astype(weight_dtype), w.astype(weight_dtype),
                       preferred_element_type=jnp.float32) + b
        if i < len(params) - 1:
            h = jnp.maximum(h, 0.0)
    return h


# TODO(synk): get_distr's elite aggregation and ScalerStandard inverse-transform
# live outside forward() and (with scalers deactivated) are identity-like; they
# are not implemented as kernels.

if __name__ == "__main__":
    # Small shapes consistent with NetDense(dim_x, dim_y, num_h, dim_h, size_ensemble).
    B, dim_x, dim_y, num_h, dim_h, E = 8, 8, 1, 2, 32, 2

    key = jax.random.PRNGKey(0)
    params, key = init_net_dense_params(key, dim_x, dim_y, num_h, dim_h, size_ensemble=E)

    key, kx = jax.random.split(key)
    x = jax.random.normal(kx, (B, dim_x), jnp.float32)
    ref_f32 = _reference_net_dense(x, params)
    ref_bf16 = _reference_net_dense(x, params, weight_dtype=jnp.bfloat16)

    # Path 1: lane-packed ensemble (E*dim_h small enough for one MXU pass/layer).
    packed = pack_ensemble_params(params)
    assert packed["mode"] == "packed"
    means, stds = net_dense_forward(x, packed)
    jax.block_until_ready((means, stds))
    assert means.shape == (E, B, dim_y) and stds.shape == (E, B, dim_y)
    assert jnp.allclose(means, ref_bf16, rtol=1e-3, atol=1e-3)   # bf16-matched reference
    assert jnp.allclose(means, ref_f32, rtol=5e-2, atol=1e-1)    # f32 sanity check
    assert jnp.all(stds == 1.0)

    # Path 2: per-member grid (what large E*dim_h falls back to), at a batch
    # that is NOT a multiple of the tile (exercises wrapper-side padding).
    per_member = pack_ensemble_params(params, max_packed_width=0)
    assert per_member["mode"] == "per_member"
    B2 = 100
    key, kx2 = jax.random.split(key)
    x2 = jax.random.normal(kx2, (B2, dim_x), jnp.float32)
    ref2_f32 = _reference_net_dense(x2, params)
    ref2_bf16 = _reference_net_dense(x2, params, weight_dtype=jnp.bfloat16)
    means2, stds2 = net_dense_forward(x2, per_member, batch_tile=32)
    jax.block_until_ready((means2, stds2))
    assert means2.shape == (E, B2, dim_y) and stds2.shape == (E, B2, dim_y)
    assert jnp.allclose(means2, ref2_bf16, rtol=1e-3, atol=1e-3)
    assert jnp.allclose(means2, ref2_f32, rtol=5e-2, atol=1e-1)
    assert jnp.all(stds2 == 1.0)

    print("KERNEL_OK")
</pallas_src>

<mosaic_0001>
module attributes {stable_mosaic.version = 11 : i64} {
  func.func @_packed_mlp_kernel(%arg0: i32, %arg1: memref<8x8xf32, #tpu.memory_space<vmem>>, %arg2: memref<8x64xbf16, #tpu.memory_space<vmem>>, %arg3: memref<1x64xf32, #tpu.memory_space<vmem>>, %arg4: memref<64x64xbf16, #tpu.memory_space<vmem>>, %arg5: memref<1x64xf32, #tpu.memory_space<vmem>>, %arg6: memref<64x128xbf16, #tpu.memory_space<vmem>>, %arg7: memref<1x128xf32, #tpu.memory_space<vmem>>, %arg8: memref<8x128xf32, #tpu.memory_space<vmem>>) attributes {dimension_semantics = [#tpu.dimension_semantics<parallel>], iteration_bounds = array<i64: 1>, scalar_prefetch = 0 : i64, scratch_operands = 0 : i64, tpu.core_type = #tpu.core_type<tc>, window_params = [{transform_indices = @transform_0, window_bounds = array<i64: 8, 8>}, {pipeline_mode = #tpu.pipeline_mode<synchronous>, transform_indices = @transform_1, window_bounds = array<i64: 8, 64>}, {pipeline_mode = #tpu.pipeline_mode<synchronous>, transform_indices = @transform_2, window_bounds = array<i64: 1, 64>}, {pipeline_mode = #tpu.pipeline_mode<synchronous>, transform_indices = @transform_3, window_bounds = array<i64: 64, 64>}, {pipeline_mode = #tpu.pipeline_mode<synchronous>, transform_indices = @transform_4, window_bounds = array<i64: 1, 64>}, {pipeline_mode = #tpu.pipeline_mode<synchronous>, transform_indices = @transform_5, window_bounds = array<i64: 64, 128>}, {pipeline_mode = #tpu.pipeline_mode<synchronous>, transform_indices = @transform_6, window_bounds = array<i64: 1, 128>}, {transform_indices = @transform_7, window_bounds = array<i64: 8, 128>}]} {
    %c0 = arith.constant 0 : index
    %c0_0 = arith.constant 0 : index
    %0 = vector.load %arg1[%c0, %c0_0] : memref<8x8xf32, #tpu.memory_space<vmem>>, vector<8x8xf32>
    %c0_1 = arith.constant 0 : index
    %c0_2 = arith.constant 0 : index
    %1 = vector.load %arg2[%c0_1, %c0_2] : memref<8x64xbf16, #tpu.memory_space<vmem>>, vector<8x64xbf16>
    %c0_3 = arith.constant 0 : index
    %c0_4 = arith.constant 0 : index
    %2 = vector.load %arg3[%c0_3, %c0_4] : memref<1x64xf32, #tpu.memory_space<vmem>>, vector<1x64xf32>
    %3 = arith.truncf %0 : vector<8x8xf32> to vector<8x8xbf16>
    %cst = arith.constant dense<0.000000e+00> : vector<8x64xf32>
    %4 = tpu.matmul %3, %1, %cst {dimension_numbers = #tpu.dot_dimension_numbers<[1], [0], [0], [1], [0, 0, 1, 1], [], []>} : vector<8x8xbf16>, vector<8x64xbf16>, vector<8x64xf32> -> vector<8x64xf32>
    %5 = vector.broadcast %2 : vector<1x64xf32> to vector<8x64xf32>
    %6 = arith.addf %4, %5 : vector<8x64xf32>
    %cst_5 = arith.constant 0.000000e+00 : f32
    %7 = vector.broadcast %cst_5 : f32 to vector<8x64xf32>
    %8 = arith.maximumf %6, %7 : vector<8x64xf32>
    %c0_6 = arith.constant 0 : index
    %c0_7 = arith.constant 0 : index
    %9 = vector.load %arg4[%c0_6, %c0_7] : memref<64x64xbf16, #tpu.memory_space<vmem>>, vector<64x64xbf16>
    %c0_8 = arith.constant 0 : index
    %c0_9 = arith.constant 0 : index
    %10 = vector.load %arg5[%c0_8, %c0_9] : memref<1x64xf32, #tpu.memory_space<vmem>>, vector<1x64xf32>
    %11 = arith.truncf %8 : vector<8x64xf32> to vector<8x64xbf16>
    %cst_10 = arith.constant dense<0.000000e+00> : vector<8x64xf32>
    %12 = tpu.matmul %11, %9, %cst_10 {dimension_numbers = #tpu.dot_dimension_numbers<[1], [0], [0], [1], [0, 0, 1, 1], [], []>} : vector<8x64xbf16>, vector<64x64xbf16>, vector<8x64xf32> -> vector<8x64xf32>
    %13 = vector.broadcast %10 : vector<1x64xf32> to vector<8x64xf32>
    %14 = arith.addf %12, %13 : vector<8x64xf32>
    %cst_11 = arith.constant 0.000000e+00 : f32
    %15 = vector.broadcast %cst_11 : f32 to vector<8x64xf32>
    %16 = arith.maximumf %14, %15 : vector<8x64xf32>
    %c0_12 = arith.constant 0 : index
    %c0_13 = arith.constant 0 : index
    %17 = vector.load %arg6[%c0_12, %c0_13] : memref<64x128xbf16, #tpu.memory_space<vmem>>, vector<64x128xbf16>
    %c0_14 = arith.constant 0 : index
    %c0_15 = arith.constant 0 : index
    %18 = vector.load %arg7[%c0_14, %c0_15] : memref<1x128xf32, #tpu.memory_space<vmem>>, vector<1x128xf32>
    %19 = arith.truncf %16 : vector<8x64xf32> to vector<8x64xbf16>
    %cst_16 = arith.constant dense<0.000000e+00> : vector<8x128xf32>
    %20 = tpu.matmul %19, %17, %cst_16 {dimension_numbers = #tpu.dot_dimension_numbers<[1], [0], [0], [1], [0, 0, 1, 1], [], []>} : vector<8x64xbf16>, vector<64x128xbf16>, vector<8x128xf32> -> vector<8x128xf32>
    %21 = vector.broadcast %18 : vector<1x128xf32> to vector<8x128xf32>
    %22 = arith.addf %20, %21 : vector<8x128xf32>
    %c0_17 = arith.constant 0 : index
    %c0_18 = arith.constant 0 : index
    %23 = vector.load %arg8[%c0_17, %c0_18] : memref<8x128xf32, #tpu.memory_space<vmem>>, vector<8x128xf32>
    tpu.vector_store %arg8[%c0_17, %c0_18], %22 {strides = array<i32>} : memref<8x128xf32, #tpu.memory_space<vmem>>, vector<8x128xf32>,
    return
  }
  func.func @transform_0(%arg0: i32) -> (i32, i32) {
    %c0_i32 = arith.constant 0 : i32
    %c0_i32_0 = arith.constant 0 : i32
    return %arg0, %c0_i32 : i32, i32
  }
  func.func @transform_1(%arg0: i32) -> (i32, i32) {
    %c0_i32 = arith.constant 0 : i32
    %c0_i32_0 = arith.constant 0 : i32
    %c0_i32_1 = arith.constant 0 : i32
    return %c0_i32, %c0_i32_0 : i32, i32
  }
  func.func @transform_2(%arg0: i32) -> (i32, i32) {
    %c0_i32 = arith.constant 0 : i32
    %c0_i32_0 = arith.constant 0 : i32
    %c0_i32_1 = arith.constant 0 : i32
    return %c0_i32, %c0_i32_0 : i32, i32
  }
  func.func @transform_3(%arg0: i32) -> (i32, i32) {
    %c0_i32 = arith.constant 0 : i32
    %c0_i32_0 = arith.constant 0 : i32
    %c0_i32_1 = arith.constant 0 : i32
    return %c0_i32, %c0_i32_0 : i32, i32
  }
  func.func @transform_4(%arg0: i32) -> (i32, i32) {
    %c0_i32 = arith.constant 0 : i32
    %c0_i32_0 = arith.constant 0 : i32
    %c0_i32_1 = arith.constant 0 : i32
    return %c0_i32, %c0_i32_0 : i32, i32
  }
  func.func @transform_5(%arg0: i32) -> (i32, i32) {
    %c0_i32 = arith.constant 0 : i32
    %c0_i32_0 = arith.constant 0 : i32
    %c0_i32_1 = arith.constant 0 : i32
    return %c0_i32, %c0_i32_0 : i32, i32
  }
  func.func @transform_6(%arg0: i32) -> (i32, i32) {
    %c0_i32 = arith.constant 0 : i32
    %c0_i32_0 = arith.constant 0 : i32
    %c0_i32_1 = arith.constant 0 : i32
    return %c0_i32, %c0_i32_0 : i32, i32
  }
  func.func @transform_7(%arg0: i32) -> (i32, i32) {
    %c0_i32 = arith.constant 0 : i32
    %c0_i32_0 = arith.constant 0 : i32
    return %arg0, %c0_i32 : i32, i32
  }
}

</mosaic_0001>

<llo_original>
// kernel: tpu_custom_call.1
$region0: #{tpu_custom_call.1}
  #allocation0 [shape = 'u32[]', space=smem, size = 0x4, offset = 0x4, fixed_abs, tag = 'smem constant byte address 0x4 - core index']
  #allocation1 [shape = 'u32[144,128]{1,0:T(1,128)}', space=vmem, size = 0x12000, scoped, tag = 'internal scratch']
  %s0 = inlined_call_operand.hbm [shape: f32[8,8], index: 0, kind: input, shape index: {}]
  %s1 = inlined_call_operand.hbm [shape: bf16[8,64], index: 1, kind: input, shape index: {}]
  %s2 = inlined_call_operand.vmem [shape: f32[1,64], index: 2, kind: input, shape index: {}]
  %s3 = inlined_call_operand.hbm [shape: bf16[64,64], index: 3, kind: input, shape index: {}]
  %s4 = inlined_call_operand.vmem [shape: f32[1,64], index: 4, kind: input, shape index: {}]
  %s5 = inlined_call_operand.hbm [shape: bf16[64,128], index: 5, kind: input, shape index: {}]
  %s6 = inlined_call_operand.vmem [shape: f32[1,128], index: 6, kind: input, shape index: {}]
  %s7 = inlined_call_operand.hbm [shape: f32[8,128], index: 7, kind: output, shape index: {}]
  %s8 = sld [smem:[#allocation0]]
  $region54: #{tpu_custom_call.1} parent=0
    _
  %s10 = ssub.s32 1, %s8
  %s11 = scalar_select 0, %s10, %s8
  $region1: #{tpu_custom_call.1} parent=0
    #allocation2 [shape = 'u8[4096]{0}', space=vmem, size = 0x1000, scoped, tag = 'input window, operand 0, single buffered']
    #allocation3 [shape = 's32[1]{0}', space=sflag, size = 0x4, scoped, tag = 'scoped memory for tpu_custom_call.1']
    #allocation4 [shape = 's32[1]{0}', space=sflag, size = 0x4, scoped, tag = 'scoped memory for tpu_custom_call.1']
    #allocation5 [shape = 'u8[2048]{0}', space=vmem, size = 0x800, scoped, tag = 'input window, operand 1, single buffered']
    #allocation6 [shape = 's32[1]{0}', space=sflag, size = 0x4, scoped, tag = 'scoped memory for tpu_custom_call.1']
    #allocation7 [shape = 'u8[16384]{0}', space=vmem, size = 0x4000, scoped, tag = 'input window, operand 3, single buffered']
    #allocation8 [shape = 'u8[16384]{0}', space=vmem, size = 0x4000, scoped, tag = 'input window, operand 5, single buffered']
    #allocation9 [shape = 's32[1]{0}', space=sflag, size = 0x4, scoped, tag = 'scoped memory for tpu_custom_call.1']
    #allocation10 [shape = 'u8[4096]{0}', space=vmem, size = 0x1000, scoped, tag = 'output window, operand 0, single buffered']
    %12 = vsyncpa [#allocation3], 0
    %13 = vsyncpa [#allocation6], 0
    %14 = vsyncpa [#allocation9], 0
    %15 = vsyncpa [#allocation4], 0
    // Predicated region
    $region2: #{tpu_custom_call.1} parent=1 // pred_check
      _
    $region3: #{tpu_custom_call.1} parent=1 // pred_check_branch
      %17 = sbr.rel (0) target = $region5
    $region4: #{tpu_custom_call.1} parent=1 // pred_region
      %s19 = ssub.s32 128, 128
      %20 = vsyncadd [#allocation3], %s19
      %s22 = sshll.u32 [#allocation2], 4
      %s23 = int_to_ptr.vmem [resolvable:$true] %s22
      %25 = dma.hbm_to_vmem [thread:$0]  %s0, 128, %s23, [#allocation3]
    $region5: #{tpu_custom_call.1} parent=1 // pred_fallthru
      _
    // Predicated region
    $region6: #{tpu_custom_call.1} parent=1 // pred_check
      _
    $region7: #{tpu_custom_call.1} parent=1 // pred_check_branch
      %27 = sbr.rel (0) target = $region9
    $region8: #{tpu_custom_call.1} parent=1 // pred_region
      %s29 = ssub.s32 64, 64
      %30 = vsyncadd [#allocation6], %s29
      %s32 = sshll.u32 [#allocation5], 4
      %s33 = int_to_ptr.vmem [resolvable:$true] %s32
      %35 = dma.hbm_to_vmem [thread:$0]  %s1, 64, %s33, [#allocation6]
    $region9: #{tpu_custom_call.1} parent=1 // pred_fallthru
      _
    // Predicated region
    $region10: #{tpu_custom_call.1} parent=1 // pred_check
      _
    $region11: #{tpu_custom_call.1} parent=1 // pred_check_branch
      %37 = sbr.rel (0) target = $region13
    $region12: #{tpu_custom_call.1} parent=1 // pred_region
      _
    $region13: #{tpu_custom_call.1} parent=1 // pred_fallthru
      _
    // Predicated region
    $region14: #{tpu_custom_call.1} parent=1 // pred_check
      _
    $region15: #{tpu_custom_call.1} parent=1 // pred_check_branch
      %39 = sbr.rel (0) target = $region17
    $region16: #{tpu_custom_call.1} parent=1 // pred_region
      %s41 = ssub.s32 512, 512
      %42 = vsyncadd [#allocation6], %s41
      %s43 = sshll.u32 [#allocation7], 4
      %s44 = int_to_ptr.vmem [resolvable:$true] %s43
      %49 = dma.hbm_to_vmem [thread:$0]  %s3, 512, %s44, [#allocation6], 64, 64, 4
    $region17: #{tpu_custom_call.1} parent=1 // pred_fallthru
      _
    // Predicated region
    $region18: #{tpu_custom_call.1} parent=1 // pred_check
      _
    $region19: #{tpu_custom_call.1} parent=1 // pred_check_branch
      %51 = sbr.rel (0) target = $region21
    $region20: #{tpu_custom_call.1} parent=1 // pred_region
      _
    $region21: #{tpu_custom_call.1} parent=1 // pred_fallthru
      _
    // Predicated region
    $region22: #{tpu_custom_call.1} parent=1 // pred_check
      _
    $region23: #{tpu_custom_call.1} parent=1 // pred_check_branch
      %53 = sbr.rel (0) target = $region25
    $region24: #{tpu_custom_call.1} parent=1 // pred_region
      %s55 = ssub.s32 512, 512
      %56 = vsyncadd [#allocation9], %s55
      %s57 = sshll.u32 [#allocation8], 4
      %s58 = int_to_ptr.vmem [resolvable:$true] %s57
      %63 = dma.hbm_to_vmem [thread:$0]  %s5, 512, %s58, [#allocation9], 64, 64, 4
    $region25: #{tpu_custom_call.1} parent=1 // pred_fallthru
      _
    // Predicated region
    $region26: #{tpu_custom_call.1} parent=1 // pred_check
      _
    $region27: #{tpu_custom_call.1} parent=1 // pred_check_branch
      %65 = sbr.rel (0) target = $region29
    $region28: #{tpu_custom_call.1} parent=1 // pred_region
      _
    $region29: #{tpu_custom_call.1} parent=1 // pred_fallthru
      _
    // Predicated region
    $region30: #{tpu_custom_call.1} parent=1 // pred_check
      _
    $region31: #{tpu_custom_call.1} parent=1 // pred_check_branch
      %67 = sbr.rel (0) target = $region33
    $region32: #{tpu_custom_call.1} parent=1 // pred_region
      %68 = dma.done [#allocation3], 128
    $region33: #{tpu_custom_call.1} parent=1 // pred_fallthru
      _
    // Predicated region
    $region34: #{tpu_custom_call.1} parent=1 // pred_check
      _
    $region35: #{tpu_custom_call.1} parent=1 // pred_check_branch
      %70 = sbr.rel (0) target = $region37
    $region36: #{tpu_custom_call.1} parent=1 // pred_region
      %71 = dma.done [#allocation6], 64
    $region37: #{tpu_custom_call.1} parent=1 // pred_fallthru
      _
    // Predicated region
    $region38: #{tpu_custom_call.1} parent=1 // pred_check
      _
    $region39: #{tpu_custom_call.1} parent=1 // pred_check_branch
      %73 = sbr.rel (0) target = $region41
    $region40: #{tpu_custom_call.1} parent=1 // pred_region
      %74 = dma.done [#allocation6], 512
    $region41: #{tpu_custom_call.1} parent=1 // pred_fallthru
      _
    // Predicated region
    $region42: #{tpu_custom_call.1} parent=1 // pred_check
      _
    $region43: #{tpu_custom_call.1} parent=1 // pred_check_branch
      %76 = sbr.rel (0) target = $region45
    $region44: #{tpu_custom_call.1} parent=1 // pred_region
      %77 = dma.done [#allocation9], 512
    $region45: #{tpu_custom_call.1} parent=1 // pred_fallthru
      _
    %v79 = vld [vmem:[#allocation2] sm:$0xff]
    %v80 = vld [vmem:[#allocation5] sm:$0xf]
    %v81 = vld [vmem:[%s2] sm:$0x1]
    %v82 = vpack.c.bf16 %v79, %v79
    %v84 = vlaneseq
    %v85 = vshrl.u32 %v84, 7
    %v86 = vsub.s32 0, %v85
    %v87 = vrot.slane %v81, %v86
    %vm89 = vcmask 64512
    %v91 = vsel %vm89, %v82, 0
    %vm93 = vcmask 1043456
    %v95 = vsel %vm93, %v80, 0
    %97 = vmatprep.subr.bf16.mxu0 0
    %98 = vmatpush1.bf16.msra.mxu0 0
    %99 = vmatprep.subr.bf16.mxu0 0
    %100 = vmatpush1.bf16.msra.mxu0 0
    %101 = vmatprep.subr.bf16.mxu0 0
    %102 = vmatpush1.bf16.msra.mxu0 0
    %103 = vmatprep.subr.bf16.mxu0 0
    %104 = vmatpush1.bf16.msra.mxu0 0
    %105 = vmatprep.subr.bf16.mxu0 0
    %106 = vmatpush1.bf16.msra.mxu0 0
    %107 = vmatprep.subr.bf16.mxu0 0
    %108 = vmatpush1.bf16.msra.mxu0 0
    %109 = vmatprep.subr.bf16.mxu0 0
    %110 = vmatpush1.bf16.msra.mxu0 0
    %111 = vmatprep.subr.bf16.mxu0 0
    %112 = vmatpush1.bf16.msra.mxu0 %v95
    %113 = vmatprep.subr.bf16.mxu0 0
    %114 = vmatpush2.bf16.msra.mxu0 0
    %115 = vmatprep.subr.bf16.mxu0 0
    %116 = vmatpush2.bf16.msra.mxu0 0
    %117 = vmatprep.subr.bf16.mxu0 0
    %118 = vmatpush2.bf16.msra.mxu0 0
    %119 = vmatprep.subr.bf16.mxu0 0
    %120 = vmatpush2.bf16.msra.mxu0 0
    %121 = vmatprep.subr.bf16.mxu0 0
    %122 = vmatpush2.bf16.msra.mxu0 0
    %123 = vmatprep.subr.bf16.mxu0 0
    %124 = vmatpush2.bf16.msra.mxu0 0
    %125 = vmatprep.subr.bf16.mxu0 0
    %126 = vmatpush2.bf16.msra.mxu0 0
    %127 = vmatprep.subr.bf16.mxu0 0
    %128 = vmatpush2.bf16.msra.mxu0 0
    %129 = vmatprep.mubr.bf16.mxu0 0
    %130 = vmatmul.mubr.bf16.gmra.mxu0 %v91
    %v131 = vpop.f32.mrf.mxu0
    %v132 = vadd.f32 %v87, %v131
    %v133 = vpop.f32.mrf.mxu0
    %v134 = vpop.f32.mrf.mxu0
    %v135 = vpop.f32.mrf.mxu0
    %136 = vdwg.mxu0
    %v137 = vmax.f32 %v132, 0.0
    %v138 = vld [vmem:[#allocation7] sm:$0xf]
    %v139 = vld [vmem:[#allocation7 + $0x4] sm:$0xf]
    %v140 = vld [vmem:[#allocation7 + $0x8] sm:$0xf]
    %v141 = vld [vmem:[#allocation7 + $0xc] sm:$0xf]
    %v142 = vld [vmem:[#allocation7 + $0x10] sm:$0xf]
    %v143 = vld [vmem:[#allocation7 + $0x14] sm:$0xf]
    %v144 = vld [vmem:[#allocation7 + $0x18] sm:$0xf]
    %v145 = vld [vmem:[#allocation7 + $0x1c] sm:$0xf]
    %v146 = vld [vmem:[%s4] sm:$0x1]
    %v147 = vpack.c.bf16 %v137, %v137
    %v149 = vlaneseq
    %v150 = vshrl.u32 %v149, 7
    %v151 = vsub.s32 0, %v150
    %v152 = vrot.slane %v146, %v151
    %v162 = vunpack.c.l.b16 %v138
    %v163 = vunpack.c.l.b16 %v139
    %v164 = vunpack.c.l.b16 %v140
    %v165 = vunpack.c.l.b16 %v141
    %v166 = vunpack.c.l.b16 %v142
    %v167 = vunpack.c.l.b16 %v143
    %v168 = vunpack.c.l.b16 %v144
    %v169 = vunpack.c.l.b16 %v145
    %v170 = vpack.c.b16 %v163, %v162
    %v171 = vpack.c.b16 %v165, %v164
    %v172 = vpack.c.b16 %v167, %v166
    %v173 = vpack.c.b16 %v169, %v168
    %vm178 = vcmask 523264
    %v180 = vsel %vm178, %v147, 0
    %182 = vmatprep.subr.bf16.mxu0 0
    %183 = vmatpush1.bf16.msra.mxu0 0
    %184 = vmatprep.subr.bf16.mxu0 0
    %185 = vmatpush1.bf16.msra.mxu0 0
    %186 = vmatprep.subr.bf16.mxu0 0
    %187 = vmatpush1.bf16.msra.mxu0 0
    %188 = vmatprep.subr.bf16.mxu0 0
    %189 = vmatpush1.bf16.msra.mxu0 0
    %190 = vmatprep.subr.bf16.mxu0 0
    %191 = vmatpush1.bf16.msra.mxu0 %v173
    %192 = vmatprep.subr.bf16.mxu0 0
    %193 = vmatpush1.bf16.msra.mxu0 %v172
    %194 = vmatprep.subr.bf16.mxu0 0
    %195 = vmatpush1.bf16.msra.mxu0 %v171
    %196 = vmatprep.subr.bf16.mxu0 0
    %197 = vmatpush1.bf16.msra.mxu0 %v170
    %198 = vmatprep.subr.bf16.mxu0 0
    %199 = vmatpush2.bf16.msra.mxu0 0
    %200 = vmatprep.subr.bf16.mxu0 0
    %201 = vmatpush2.bf16.msra.mxu0 0
    %202 = vmatprep.subr.bf16.mxu0 0
    %203 = vmatpush2.bf16.msra.mxu0 0
    %204 = vmatprep.subr.bf16.mxu0 0
    %205 = vmatpush2.bf16.msra.mxu0 0
    %206 = vmatprep.subr.bf16.mxu0 0
    %207 = vmatpush2.bf16.msra.mxu0 0
    %208 = vmatprep.subr.bf16.mxu0 0
    %209 = vmatpush2.bf16.msra.mxu0 0
    %210 = vmatprep.subr.bf16.mxu0 0
    %211 = vmatpush2.bf16.msra.mxu0 0
    %212 = vmatprep.subr.bf16.mxu0 0
    %213 = vmatpush2.bf16.msra.mxu0 0
    %214 = vmatprep.mubr.bf16.mxu0 0
    %215 = vmatmul.mubr.bf16.gmra.mxu0 %v180
    %v216 = vpop.f32.mrf.mxu0
    %v217 = vadd.f32 %v152, %v216
    %v218 = vpop.f32.mrf.mxu0
    %v219 = vpop.f32.mrf.mxu0
    %v220 = vpop.f32.mrf.mxu0
    %221 = vdwg.mxu0
    %v222 = vmax.f32 %v217, 0.0
    %v223 = vld [vmem:[#allocation8] sm:$0xf]
    %v224 = vld [vmem:[#allocation8 + $0x4] sm:$0xf]
    %v225 = vld [vmem:[#allocation8 + $0x8] sm:$0xf]
    %v226 = vld [vmem:[#allocation8 + $0xc] sm:$0xf]
    %v227 = vld [vmem:[#allocation8 + $0x10] sm:$0xf]
    %v228 = vld [vmem:[#allocation8 + $0x14] sm:$0xf]
    %v229 = vld [vmem:[#allocation8 + $0x18] sm:$0xf]
    %v230 = vld [vmem:[#allocation8 + $0x1c] sm:$0xf]
    %v231 = vld [vmem:[%s6] sm:$0x1]
    %v232 = vpack.c.bf16 %v222, %v222
    %v234 = vlaneseq
    %v235 = vshrl.u32 %v234, 7
    %v236 = vsub.s32 0, %v235
    %v237 = vrot.slane %v231, %v236
    %v247 = vunpack.c.l.b16 %v223
    %v248 = vunpack.c.l.b16 %v224
    %v249 = vunpack.c.l.b16 %v225
    %v250 = vunpack.c.l.b16 %v226
    %v251 = vunpack.c.l.b16 %v227
    %v252 = vunpack.c.l.b16 %v228
    %v253 = vunpack.c.l.b16 %v229
    %v254 = vunpack.c.l.b16 %v230
    %v255 = vpack.c.b16 %v248, %v247
    %v256 = vpack.c.b16 %v250, %v249
    %v257 = vpack.c.b16 %v252, %v251
    %v258 = vpack.c.b16 %v254, %v253
    %v264 = vsel %vm178, %v232, 0
    %266 = vmatprep.subr.bf16.mxu0 0
    %267 = vmatpush1.bf16.msra.mxu0 0
    %268 = vmatprep.subr.bf16.mxu0 0
    %269 = vmatpush1.bf16.msra.mxu0 0
    %270 = vmatprep.subr.bf16.mxu0 0
    %271 = vmatpush1.bf16.msra.mxu0 0
    %272 = vmatprep.subr.bf16.mxu0 0
    %273 = vmatpush1.bf16.msra.mxu0 0
    %274 = vmatprep.subr.bf16.mxu0 0
    %275 = vmatpush1.bf16.msra.mxu0 %v258
    %276 = vmatprep.subr.bf16.mxu0 0
    %277 = vmatpush1.bf16.msra.mxu0 %v257
    %278 = vmatprep.subr.bf16.mxu0 0
    %279 = vmatpush1.bf16.msra.mxu0 %v256
    %280 = vmatprep.subr.bf16.mxu0 0
    %281 = vmatpush1.bf16.msra.mxu0 %v255
    %282 = vmatprep.subr.bf16.mxu0 0
    %283 = vmatpush2.bf16.msra.mxu0 0
    %284 = vmatprep.subr.bf16.mxu0 0
    %285 = vmatpush2.bf16.msra.mxu0 0
    %286 = vmatprep.subr.bf16.mxu0 0
    %287 = vmatpush2.bf16.msra.mxu0 0
    %288 = vmatprep.subr.bf16.mxu0 0
    %289 = vmatpush2.bf16.msra.mxu0 0
    %290 = vmatprep.subr.bf16.mxu0 0
    %291 = vmatpush2.bf16.msra.mxu0 0
    %292 = vmatprep.subr.bf16.mxu0 0
    %293 = vmatpush2.bf16.msra.mxu0 0
    %294 = vmatprep.subr.bf16.mxu0 0
    %295 = vmatpush2.bf16.msra.mxu0 0
    %296 = vmatprep.subr.bf16.mxu0 0
    %297 = vmatpush2.bf16.msra.mxu0 0
    %298 = vmatprep.mubr.bf16.mxu0 0
    %299 = vmatmul.mubr.bf16.gmra.mxu0 %v264
    %v300 = vpop.f32.mrf.mxu0
    %v301 = vadd.f32 %v237, %v300
    %v302 = vpop.f32.mrf.mxu0
    %v303 = vpop.f32.mrf.mxu0
    %v304 = vpop.f32.mrf.mxu0
    %305 = vdwg.mxu0
    %306 = vst [vmem:[#allocation10] sm:$0xff] %v301
    // Predicated region
    $region46: #{tpu_custom_call.1} parent=1 // pred_check
      _
    $region47: #{tpu_custom_call.1} parent=1 // pred_check_branch
      %308 = sbr.rel (0) target = $region49
    $region48: #{tpu_custom_call.1} parent=1 // pred_region
      %s310 = ssub.s32 128, 128
      %311 = vsyncadd [#allocation4], %s310
      %s313 = sshll.u32 [#allocation10], 4
      %s314 = int_to_ptr.vmem [resolvable:$true] %s313
      %316 = dma.vmem_to_hbm [thread:$0]  %s314, 128, %s7, [#allocation4]
    $region49: #{tpu_custom_call.1} parent=1 // pred_fallthru
      _
    // Predicated region
    $region50: #{tpu_custom_call.1} parent=1 // pred_check
      _
    $region51: #{tpu_custom_call.1} parent=1 // pred_check_branch
      %318 = sbr.rel (0) target = $region53
    $region52: #{tpu_custom_call.1} parent=1 // pred_region
      %319 = dma.done [#allocation4], 128
    $region53: #{tpu_custom_call.1} parent=1 // pred_fallthru
      _
    %320 = vsyncpa [#allocation3], 1
    %321 = vsyncpa [#allocation6], 1
    %322 = vsyncpa [#allocation9], 1
    %323 = vsyncpa [#allocation4], 1

</llo_original>
